<compile_context>
chip_gen: v5e
topology: v5e:2x2
jax: 0.10.0
libtpu: 0.0.40
codegen_flags: <defaults>
</compile_context>

<pallas_src>
import jax
import jax.numpy as jnp
import numpy as np
from jax import lax
from jax.experimental import pallas as pl
from jax.experimental.pallas import tpu as pltpu


# --------------------------------------------------------------------------
# Kernel 1: fused q/k/v 1x1-conv projections (channels-first)
# --------------------------------------------------------------------------
def qkv_proj_kernel(x_ref,                       # VMEM (1, C, tn)  f32
                    wq_ref, wk_ref, wv_ref,      # VMEM (C8, C), (C8, C), (C, C) bf16
                    bq_ref, bk_ref, bv_ref,      # VMEM (C8, 1), (C8, 1), (C, 1) f32
                    q_ref,                       # VMEM (1, tn, C8) bf16
                    kt_ref,                      # VMEM (1, C8, tn) bf16
                    vt_ref):                     # VMEM (1, C, tn)  bf16
    x = x_ref[0].astype(jnp.bfloat16)                                   # (C, tn)
    qt = jnp.dot(wq_ref[...], x, preferred_element_type=jnp.float32) + bq_ref[...]
    kt = jnp.dot(wk_ref[...], x, preferred_element_type=jnp.float32) + bk_ref[...]
    vt = jnp.dot(wv_ref[...], x, preferred_element_type=jnp.float32) + bv_ref[...]
    # q stored as (N, C8): the attention kernel's q @ k^T is then a native
    # (M,K)x(K,N) MXU matmul with no in-loop transposes.
    q_ref[0] = qt.T.astype(q_ref.dtype)
    kt_ref[0] = kt.astype(kt_ref.dtype)
    vt_ref[0] = vt.astype(vt_ref.dtype)


# --------------------------------------------------------------------------
# Kernel 2: flash-style position attention + gamma residual
# --------------------------------------------------------------------------
def pam_flash_kernel(gamma_ref,                  # SMEM (1,) f32
                     q_ref,                      # VMEM (1, tq, C8) bf16
                     kt_ref,                     # VMEM (1, C8, tk) bf16
                     vt_ref,                     # VMEM (1, C, tk)  bf16
                     x_ref,                      # VMEM (1, C, tq)  f32 (residual)
                     o_ref,                      # VMEM (1, C, tq)  f32
                     m_sc, l_sc, acc_sc):        # VMEM (tq,1), (tq,1), (tq,C) f32
    ki = pl.program_id(2)

    @pl.when(ki == 0)
    def _init():
        m_sc[...] = jnp.full_like(m_sc, -jnp.inf)
        l_sc[...] = jnp.zeros_like(l_sc)
        acc_sc[...] = jnp.zeros_like(acc_sc)

    q = q_ref[0]                                  # (tq, C8) bf16
    kt = kt_ref[0]                                # (C8, tk) bf16 (no k.T needed)
    # energy tile on the MXU, f32 accumulation
    s = jnp.dot(q, kt, preferred_element_type=jnp.float32)              # (tq, tk)

    # online softmax (f32), deferred normalization
    m_prev = m_sc[...]                                                  # (tq, 1)
    m_new = jnp.maximum(m_prev, jnp.max(s, axis=-1, keepdims=True))
    alpha = jnp.exp(m_prev - m_new)                                     # (tq, 1)
    p = jnp.exp(s - m_new)                                              # unnormalized
    l_sc[...] = alpha * l_sc[...] + jnp.sum(p, axis=-1, keepdims=True)
    # acc += p @ v^T  — the MXU consumes the RHS transposed natively.
    pv = lax.dot_general(p.astype(vt_ref.dtype), vt_ref[0],
                         (((1,), (1,)), ((), ())),
                         preferred_element_type=jnp.float32)            # (tq, C)
    acc_sc[...] = alpha * acc_sc[...] + pv
    m_sc[...] = m_new

    @pl.when(ki == pl.num_programs(2) - 1)
    def _finalize():
        inv_l = pl.reciprocal(l_sc[...], approx=True)    # EUP slot, one divide total
        attn_t = (acc_sc[...] * inv_l).T                 # (C, tq), lane-dense store
        o_ref[0] = (gamma_ref[0] * attn_t + x_ref[0]).astype(o_ref.dtype)


# --------------------------------------------------------------------------
# Wrapper
# --------------------------------------------------------------------------
def pam_module_forward(x_nchw, wq, bq, wk, bk, wv, bv, gamma, *, tile_n=128):
    """x_nchw: (B, C, H, W) f32. wq/wk: (C//8, C), wv: (C, C) — torch conv layout."""
    B, C, H, W = x_nchw.shape
    N = H * W
    C8 = wq.shape[0]

    # channels-first flattening is a free reshape (no HBM transpose)
    x_bcn = x_nchw.reshape(B, C, N)

    # spatial tile: 128-lane aligned when possible, else the full extent
    tn = tile_n if (N % tile_n == 0) else N
    tq = tn
    tk = tn

    # bf16 MXU operands (f32 accumulation / softmax inside the kernels)
    wq_b = wq.astype(jnp.bfloat16)
    wk_b = wk.astype(jnp.bfloat16)
    wv_b = wv.astype(jnp.bfloat16)
    bq2 = bq.reshape(C8, 1).astype(jnp.float32)
    bk2 = bk.reshape(C8, 1).astype(jnp.float32)
    bv2 = bv.reshape(C, 1).astype(jnp.float32)
    gamma_f = gamma.astype(jnp.float32)

    # ---- kernel 1: q/k/v projections ------------------------------------
    q, kt, vt = pl.pallas_call(
        qkv_proj_kernel,
        out_shape=(jax.ShapeDtypeStruct((B, N, C8), jnp.bfloat16),
                   jax.ShapeDtypeStruct((B, C8, N), jnp.bfloat16),
                   jax.ShapeDtypeStruct((B, C, N), jnp.bfloat16)),
        grid_spec=pltpu.PrefetchScalarGridSpec(
            num_scalar_prefetch=0,
            grid=(B, N // tn),
            in_specs=[
                pl.BlockSpec((1, C, tn), lambda b, n: (b, 0, n)),   # x
                pl.BlockSpec((C8, C), lambda b, n: (0, 0)),         # Wq
                pl.BlockSpec((C8, C), lambda b, n: (0, 0)),         # Wk
                pl.BlockSpec((C, C), lambda b, n: (0, 0)),          # Wv
                pl.BlockSpec((C8, 1), lambda b, n: (0, 0)),         # bq
                pl.BlockSpec((C8, 1), lambda b, n: (0, 0)),         # bk
                pl.BlockSpec((C, 1), lambda b, n: (0, 0)),          # bv
            ],
            out_specs=[
                pl.BlockSpec((1, tn, C8), lambda b, n: (b, n, 0)),  # q   (N, C8)
                pl.BlockSpec((1, C8, tn), lambda b, n: (b, 0, n)),  # k^T (C8, N)
                pl.BlockSpec((1, C, tn), lambda b, n: (b, 0, n)),   # v^T (C, N)
            ],
        ),
        compiler_params=pltpu.CompilerParams(
            dimension_semantics=("parallel", "parallel")),
    )(x_bcn, wq_b, wk_b, wv_b, bq2, bk2, bv2)

    # ---- kernel 2: flash attention + residual ----------------------------
    out_bcn = pl.pallas_call(
        pam_flash_kernel,
        out_shape=jax.ShapeDtypeStruct((B, C, N), x_nchw.dtype),
        grid_spec=pltpu.PrefetchScalarGridSpec(
            num_scalar_prefetch=0,
            grid=(B, N // tq, N // tk),
            in_specs=[
                pl.BlockSpec(memory_space=pltpu.MemorySpace.SMEM),          # gamma
                pl.BlockSpec((1, tq, C8), lambda b, qi, ki: (b, qi, 0)),    # q tile
                pl.BlockSpec((1, C8, tk), lambda b, qi, ki: (b, 0, ki)),    # k^T tile
                pl.BlockSpec((1, C, tk), lambda b, qi, ki: (b, 0, ki)),     # v^T tile
                pl.BlockSpec((1, C, tq), lambda b, qi, ki: (b, 0, qi)),     # x tile
            ],
            out_specs=pl.BlockSpec((1, C, tq), lambda b, qi, ki: (b, 0, qi)),
            scratch_shapes=[
                pltpu.VMEM((tq, 1), jnp.float32),   # running max m
                pltpu.VMEM((tq, 1), jnp.float32),   # running sum l
                pltpu.VMEM((tq, C), jnp.float32),   # unnormalized accumulator
            ],
        ),
        compiler_params=pltpu.CompilerParams(
            dimension_semantics=("parallel", "parallel", "arbitrary")),
    )(gamma_f, q, kt, vt, x_bcn)

    return out_bcn.reshape(B, C, H, W)


# --------------------------------------------------------------------------
# Reference + test
# --------------------------------------------------------------------------
def _xavier_uniform(key, out_ch, in_ch):
    # torch.nn.init.xavier_uniform_ on an (out, in, 1, 1) conv weight
    bound = float(np.sqrt(6.0 / (in_ch + out_ch)))
    return jax.random.uniform(key, (out_ch, in_ch), jnp.float32, -bound, bound)


def _reference(x_nchw, wq, bq, wk, bk, wv, bv, gamma):
    B, C, H, W = x_nchw.shape
    N = H * W
    x = x_nchw.reshape(B, C, N)
    q = jnp.einsum('oc,bcn->bon', wq, x) + bq[None, :, None]    # (B, C8, N)
    k = jnp.einsum('oc,bcn->bon', wk, x) + bk[None, :, None]    # (B, C8, N)
    v = jnp.einsum('oc,bcn->bon', wv, x) + bv[None, :, None]    # (B, C, N)
    energy = jnp.einsum('bdi,bdj->bij', q, k)                   # (B, N, N)
    att = jax.nn.softmax(energy, axis=-1)
    out = jnp.einsum('bij,bcj->bci', att, v)                    # (B, C, N)
    out = gamma[0] * out + x
    return out.reshape(B, C, H, W)


if __name__ == "__main__":
    B, C, H, W = 2, 32, 16, 16        # in_dim must be >= 8 so in_dim // 8 >= 1
    C8 = C // 8

    key = jax.random.PRNGKey(0)
    kx, kq, kk, kv = jax.random.split(key, 4)

    x = jax.random.normal(kx, (B, C, H, W), jnp.float32)

    # parameters (shapes from PAM_Module.__init__, torch conv (out, in) layout)
    wq = _xavier_uniform(kq, C8, C)
    wk = _xavier_uniform(kk, C8, C)
    wv = _xavier_uniform(kv, C, C)
    bq = jnp.zeros((C8,), jnp.float32)
    bk = jnp.zeros((C8,), jnp.float32)
    bv = jnp.zeros((C,), jnp.float32)
    # torch inits gamma to 0 (which would zero the attention branch); use a
    # nonzero deterministic value so the attention path is exercised.
    gamma = jnp.full((1,), 0.5, jnp.float32)

    out = pam_module_forward(x, wq, bq, wk, bk, wv, bv, gamma)
    out = jax.block_until_ready(out)

    ref = _reference(x, wq, bq, wk, bk, wv, bv, gamma)
    # bf16 MXU operands + approx reciprocal -> looser tolerance (softmax math is f32)
    np.testing.assert_allclose(np.asarray(out), np.asarray(ref),
                               rtol=3e-2, atol=3e-2)

    print("KERNEL_OK")
</pallas_src>

<mosaic_0001>
module attributes {stable_mosaic.version = 11 : i64} {
  func.func @qkv_proj_kernel(%arg0: i32, %arg1: i32, %arg2: memref<1x32x128xf32, #tpu.memory_space<vmem>>, %arg3: memref<4x32xbf16, #tpu.memory_space<vmem>>, %arg4: memref<4x32xbf16, #tpu.memory_space<vmem>>, %arg5: memref<32x32xbf16, #tpu.memory_space<vmem>>, %arg6: memref<4x1xf32, #tpu.memory_space<vmem>>, %arg7: memref<4x1xf32, #tpu.memory_space<vmem>>, %arg8: memref<32x1xf32, #tpu.memory_space<vmem>>, %arg9: memref<1x128x4xbf16, #tpu.memory_space<vmem>>, %arg10: memref<1x4x128xbf16, #tpu.memory_space<vmem>>, %arg11: memref<1x32x128xbf16, #tpu.memory_space<vmem>>) attributes {dimension_semantics = [#tpu.dimension_semantics<parallel>, #tpu.dimension_semantics<parallel>], iteration_bounds = array<i64: 2, 2>, scalar_prefetch = 0 : i64, scratch_operands = 0 : i64, tpu.core_type = #tpu.core_type<tc>, window_params = [{transform_indices = @transform_0, window_bounds = array<i64: 1, 32, 128>}, {pipeline_mode = #tpu.pipeline_mode<synchronous>, transform_indices = @transform_1, window_bounds = array<i64: 4, 32>}, {pipeline_mode = #tpu.pipeline_mode<synchronous>, transform_indices = @transform_2, window_bounds = array<i64: 4, 32>}, {pipeline_mode = #tpu.pipeline_mode<synchronous>, transform_indices = @transform_3, window_bounds = array<i64: 32, 32>}, {pipeline_mode = #tpu.pipeline_mode<synchronous>, transform_indices = @transform_4, window_bounds = array<i64: 4, 1>}, {pipeline_mode = #tpu.pipeline_mode<synchronous>, transform_indices = @transform_5, window_bounds = array<i64: 4, 1>}, {pipeline_mode = #tpu.pipeline_mode<synchronous>, transform_indices = @transform_6, window_bounds = array<i64: 32, 1>}, {transform_indices = @transform_7, window_bounds = array<i64: 1, 128, 4>}, {transform_indices = @transform_8, window_bounds = array<i64: 1, 4, 128>}, {transform_indices = @transform_9, window_bounds = array<i64: 1, 32, 128>}]} {
    %c0 = arith.constant 0 : index
    %c0_0 = arith.constant 0 : index
    %c0_1 = arith.constant 0 : index
    %0 = vector.load %arg2[%c0, %c0_0, %c0_1] : memref<1x32x128xf32, #tpu.memory_space<vmem>>, vector<1x32x128xf32>
    %1 = vector.shape_cast %0 : vector<1x32x128xf32> to vector<32x128xf32>
    %2 = arith.truncf %1 : vector<32x128xf32> to vector<32x128xbf16>
    %c0_2 = arith.constant 0 : index
    %c0_3 = arith.constant 0 : index
    %3 = vector.load %arg3[%c0_2, %c0_3] : memref<4x32xbf16, #tpu.memory_space<vmem>>, vector<4x32xbf16>
    %cst = arith.constant dense<0.000000e+00> : vector<4x128xf32>
    %4 = tpu.matmul %3, %2, %cst {dimension_numbers = #tpu.dot_dimension_numbers<[1], [0], [0], [1], [0, 0, 1, 1], [], []>} : vector<4x32xbf16>, vector<32x128xbf16>, vector<4x128xf32> -> vector<4x128xf32>
    %c0_4 = arith.constant 0 : index
    %c0_5 = arith.constant 0 : index
    %5 = vector.load %arg6[%c0_4, %c0_5] : memref<4x1xf32, #tpu.memory_space<vmem>>, vector<4x1xf32>
    %6 = vector.broadcast %5 : vector<4x1xf32> to vector<4x128xf32>
    %7 = arith.addf %4, %6 : vector<4x128xf32>
    %c0_6 = arith.constant 0 : index
    %c0_7 = arith.constant 0 : index
    %8 = vector.load %arg4[%c0_6, %c0_7] : memref<4x32xbf16, #tpu.memory_space<vmem>>, vector<4x32xbf16>
    %cst_8 = arith.constant dense<0.000000e+00> : vector<4x128xf32>
    %9 = tpu.matmul %8, %2, %cst_8 {dimension_numbers = #tpu.dot_dimension_numbers<[1], [0], [0], [1], [0, 0, 1, 1], [], []>} : vector<4x32xbf16>, vector<32x128xbf16>, vector<4x128xf32> -> vector<4x128xf32>
    %c0_9 = arith.constant 0 : index
    %c0_10 = arith.constant 0 : index
    %10 = vector.load %arg7[%c0_9, %c0_10] : memref<4x1xf32, #tpu.memory_space<vmem>>, vector<4x1xf32>
    %11 = vector.broadcast %10 : vector<4x1xf32> to vector<4x128xf32>
    %12 = arith.addf %9, %11 : vector<4x128xf32>
    %c0_11 = arith.constant 0 : index
    %c0_12 = arith.constant 0 : index
    %13 = vector.load %arg5[%c0_11, %c0_12] : memref<32x32xbf16, #tpu.memory_space<vmem>>, vector<32x32xbf16>
    %cst_13 = arith.constant dense<0.000000e+00> : vector<32x128xf32>
    %14 = tpu.matmul %13, %2, %cst_13 {dimension_numbers = #tpu.dot_dimension_numbers<[1], [0], [0], [1], [0, 0, 1, 1], [], []>} : vector<32x32xbf16>, vector<32x128xbf16>, vector<32x128xf32> -> vector<32x128xf32>
    %c0_14 = arith.constant 0 : index
    %c0_15 = arith.constant 0 : index
    %15 = vector.load %arg8[%c0_14, %c0_15] : memref<32x1xf32, #tpu.memory_space<vmem>>, vector<32x1xf32>
    %16 = vector.broadcast %15 : vector<32x1xf32> to vector<32x128xf32>
    %17 = arith.addf %14, %16 : vector<32x128xf32>
    %18 = tpu.transpose %7, [1, 0] : vector<4x128xf32> -> vector<128x4xf32>
    %19 = arith.truncf %18 : vector<128x4xf32> to vector<128x4xbf16>
    %c0_16 = arith.constant 0 : index
    %c0_17 = arith.constant 0 : index
    %c0_18 = arith.constant 0 : index
    %20 = vector.load %arg9[%c0_16, %c0_17, %c0_18] : memref<1x128x4xbf16, #tpu.memory_space<vmem>>, vector<1x128x4xbf16>
    %21 = vector.shape_cast %20 : vector<1x128x4xbf16> to vector<128x4xbf16>
    %22 = vector.shape_cast %19 : vector<128x4xbf16> to vector<1x128x4xbf16>
    tpu.vector_store %arg9[%c0_16, %c0_17, %c0_18], %22 {strides = array<i32>} : memref<1x128x4xbf16, #tpu.memory_space<vmem>>, vector<1x128x4xbf16>,
    %23 = arith.truncf %12 : vector<4x128xf32> to vector<4x128xbf16>
    %c0_19 = arith.constant 0 : index
    %c0_20 = arith.constant 0 : index
    %c0_21 = arith.constant 0 : index
    %24 = vector.load %arg10[%c0_19, %c0_20, %c0_21] : memref<1x4x128xbf16, #tpu.memory_space<vmem>>, vector<1x4x128xbf16>
    %25 = vector.shape_cast %24 : vector<1x4x128xbf16> to vector<4x128xbf16>
    %26 = vector.shape_cast %23 : vector<4x128xbf16> to vector<1x4x128xbf16>
    tpu.vector_store %arg10[%c0_19, %c0_20, %c0_21], %26 {strides = array<i32>} : memref<1x4x128xbf16, #tpu.memory_space<vmem>>, vector<1x4x128xbf16>,
    %27 = arith.truncf %17 : vector<32x128xf32> to vector<32x128xbf16>
    %c0_22 = arith.constant 0 : index
    %c0_23 = arith.constant 0 : index
    %c0_24 = arith.constant 0 : index
    %28 = vector.load %arg11[%c0_22, %c0_23, %c0_24] : memref<1x32x128xbf16, #tpu.memory_space<vmem>>, vector<1x32x128xbf16>
    %29 = vector.shape_cast %28 : vector<1x32x128xbf16> to vector<32x128xbf16>
    %30 = vector.shape_cast %27 : vector<32x128xbf16> to vector<1x32x128xbf16>
    tpu.vector_store %arg11[%c0_22, %c0_23, %c0_24], %30 {strides = array<i32>} : memref<1x32x128xbf16, #tpu.memory_space<vmem>>, vector<1x32x128xbf16>,
    return
  }
  func.func @transform_0(%arg0: i32, %arg1: i32) -> (i32, i32, i32) {
    %c0_i32 = arith.constant 0 : i32
    %c0_i32_0 = arith.constant 0 : i32
    return %arg0, %c0_i32, %arg1 : i32, i32, i32
  }
  func.func @transform_1(%arg0: i32, %arg1: i32) -> (i32, i32) {
    %c0_i32 = arith.constant 0 : i32
    %c0_i32_0 = arith.constant 0 : i32
    %c0_i32_1 = arith.constant 0 : i32
    return %c0_i32, %c0_i32_0 : i32, i32
  }
  func.func @transform_2(%arg0: i32, %arg1: i32) -> (i32, i32) {
    %c0_i32 = arith.constant 0 : i32
    %c0_i32_0 = arith.constant 0 : i32
    %c0_i32_1 = arith.constant 0 : i32
    return %c0_i32, %c0_i32_0 : i32, i32
  }
  func.func @transform_3(%arg0: i32, %arg1: i32) -> (i32, i32) {
    %c0_i32 = arith.constant 0 : i32
    %c0_i32_0 = arith.constant 0 : i32
    %c0_i32_1 = arith.constant 0 : i32
    return %c0_i32, %c0_i32_0 : i32, i32
  }
  func.func @transform_4(%arg0: i32, %arg1: i32) -> (i32, i32) {
    %c0_i32 = arith.constant 0 : i32
    %c0_i32_0 = arith.constant 0 : i32
    %c0_i32_1 = arith.constant 0 : i32
    return %c0_i32, %c0_i32_0 : i32, i32
  }
  func.func @transform_5(%arg0: i32, %arg1: i32) -> (i32, i32) {
    %c0_i32 = arith.constant 0 : i32
    %c0_i32_0 = arith.constant 0 : i32
    %c0_i32_1 = arith.constant 0 : i32
    return %c0_i32, %c0_i32_0 : i32, i32
  }
  func.func @transform_6(%arg0: i32, %arg1: i32) -> (i32, i32) {
    %c0_i32 = arith.constant 0 : i32
    %c0_i32_0 = arith.constant 0 : i32
    %c0_i32_1 = arith.constant 0 : i32
    return %c0_i32, %c0_i32_0 : i32, i32
  }
  func.func @transform_7(%arg0: i32, %arg1: i32) -> (i32, i32, i32) {
    %c0_i32 = arith.constant 0 : i32
    %c0_i32_0 = arith.constant 0 : i32
    return %arg0, %arg1, %c0_i32 : i32, i32, i32
  }
  func.func @transform_8(%arg0: i32, %arg1: i32) -> (i32, i32, i32) {
    %c0_i32 = arith.constant 0 : i32
    %c0_i32_0 = arith.constant 0 : i32
    return %arg0, %c0_i32, %arg1 : i32, i32, i32
  }
  func.func @transform_9(%arg0: i32, %arg1: i32) -> (i32, i32, i32) {
    %c0_i32 = arith.constant 0 : i32
    %c0_i32_0 = arith.constant 0 : i32
    return %arg0, %c0_i32, %arg1 : i32, i32, i32
  }
}

</mosaic_0001>

<llo_original>
// kernel: tpu_custom_call.1
$region0: #{tpu_custom_call.1}
  #allocation0 [shape = 'u32[]', space=smem, size = 0x4, offset = 0x4, fixed_abs, tag = 'smem constant byte address 0x4 - core index']
  #allocation1 [shape = 'u32[72,128]{1,0:T(1,128)}', space=vmem, size = 0x9000, scoped, tag = 'internal scratch']
  %s0 = inlined_call_operand.hbm [shape: f32[2,32,256], index: 0, kind: input, shape index: {}]
  %s1 = inlined_call_operand.vmem [shape: bf16[4,32], index: 1, kind: input, shape index: {}]
  %s2 = inlined_call_operand.vmem [shape: bf16[4,32], index: 2, kind: input, shape index: {}]
  %s3 = inlined_call_operand.vmem [shape: bf16[32,32], index: 3, kind: input, shape index: {}]
  %s4 = inlined_call_operand.vmem [shape: f32[4,1], index: 4, kind: input, shape index: {}]
  %s5 = inlined_call_operand.vmem [shape: f32[4,1], index: 5, kind: input, shape index: {}]
  %s6 = inlined_call_operand.vmem [shape: f32[32,1], index: 6, kind: input, shape index: {}]
  %s7 = inlined_call_operand.vmem [shape: bf16[2,256,4], index: 7, kind: output, shape index: {0}]
  %s8 = inlined_call_operand.hbm [shape: bf16[2,4,256], index: 8, kind: output, shape index: {1}]
  %s9 = inlined_call_operand.hbm [shape: bf16[2,32,256], index: 9, kind: output, shape index: {2}]
  %10 = xla_tuple %s7, %s8, %s9
  %s11 = sld [smem:[#allocation0]]
  $region81: #{tpu_custom_call.1} parent=0
    _
  %s13 = ssub.s32 1, %s11
  %s14 = scalar_select 0, %s13, %s11
  $region1: #{tpu_custom_call.1} parent=0
    #allocation2 [shape = 'u8[32768]{0}', space=vmem, size = 0x8000, scoped, tag = 'input window, operand 0']
    #allocation3 [shape = 's32[2]{0}', space=sflag, size = 0x8, scoped, tag = 'scoped memory for tpu_custom_call.1']
    #allocation4 [shape = 's32[2]{0}', space=sflag, size = 0x8, scoped, tag = 'scoped memory for tpu_custom_call.1']
    #allocation5 [shape = 'u8[2048]{0}', space=vmem, size = 0x800, scoped, tag = 'output window, operand 1']
    #allocation6 [shape = 'u8[16384]{0}', space=vmem, size = 0x4000, scoped, tag = 'output window, operand 2']
    #allocation7 [shape = 's32[2]{0}', space=sflag, size = 0x8, scoped, tag = 'scoped memory for tpu_custom_call.1']
    %15 = vsyncpa [#allocation3], 0
    %s16 = scalar_lea.sflag [#allocation3], 1
    %17 = vsyncpa %s16, 0
    %18 = vsyncpa [#allocation4], 0
    %s19 = scalar_lea.sflag [#allocation4], 1
    %20 = vsyncpa %s19, 0
    %21 = vsyncpa [#allocation7], 0
    %s22 = scalar_lea.sflag [#allocation7], 1
    %23 = vsyncpa %s22, 0
    loop: start=0, step=1, limit=6
    $region2: #{tpu_custom_call.1} parent=1 // loop_pre_header
      _
    $region3: #{tpu_custom_call.1} parent=1 // loop_header
      %s25 = sphi 0, %s29
      %p26 = scmp.ge.s32.totalorder %s25, 6
      %s32 = sphi 0, %s44
      %s33 = sphi 0, %s40
      %s34 = sphi 0, %s32
      %s35 = sphi 0, %s33
      %s36 = sphi 0, %s34
      %s37 = sphi 0, %s35
      %s49 = sphi 0, %s51
      %s52 = sphi 0, %s49
      %s53 = sphi 0, %s52
      %s69 = sphi 0, %s53
      %s73 = sphi 0, %s73
      %s75 = sphi 0, %s73
      %s76 = sphi 0, %s75
      %s90 = sphi 0, %s76
      %s94 = sphi 0, %s94
      %s96 = sphi 0, %s94
      %s97 = sphi 0, %s96
      %s111 = sphi 0, %s97
      %s115 = sphi 0, %s115
      %s117 = sphi 0, %s115
      %s118 = sphi 0, %s117
      %s132 = sphi 0, %s118
      %s136 = sphi 0, %s136
      %s138 = sphi 0, %s136
      %s139 = sphi 0, %s138
      %s153 = sphi 0, %s139
      %s157 = sphi 0, %s157
      %s159 = sphi 0, %s157
      %s160 = sphi 0, %s159
      %s174 = sphi 0, %s160
      %s178 = sphi 0, %s178
      %s180 = sphi 0, %s178
      %s181 = sphi 0, %s180
      %s195 = sphi 0, %s181
      %s203 = sphi 0, %s205
      %s206 = sphi 0, %s203
      %s207 = sphi 0, %s206
      %s223 = sphi 0, %s207
      %s231 = sphi 0, %s233
      %s234 = sphi 0, %s231
      %s235 = sphi 0, %s234
      %s251 = sphi 0, %s235
      %s259 = sphi 0, %s261
      %s262 = sphi 0, %s259
      %s263 = sphi 0, %s262
      %s279 = sphi 0, %s263
    $region4: #{tpu_custom_call.1} parent=1 // loop_header_branch
      %28 = sbr.rel (%p26) target = $region8
    $region5: #{tpu_custom_call.1} parent=1 // loop_body
      %s30 = ssub.s32 %s25, 1
      %s31 = ssub.s32 %s25, 2
      %s38 = sadd.s32 1, %s33
      %p39 = scmp.ge.s32.totalorder %s38, 2
      %s40 = scalar_select %p39, 0, %s38
      %s41 = sadd.s32 1, %s32
      %s42 = scalar_select %p39, %s41, %s32
      %p43 = scmp.ge.s32.totalorder %s42, 2
      %s44 = scalar_select %p43, 0, %s42
      %s45 = ssub.s32 %s32, %s44
      %s46 = ssub.s32 %s33, %s40
      %s47 = sor.u32 %s45, %s46
      %p48 = scmp.eq.s32.totalorder %s47, 0
      %s50 = sadd.s32 %s49, 1
      %s51 = scalar_select %p48, %s49, %s50
      %p54 = pneg %p48
      %p55 = scmp.eq.s32.totalorder %s25, 3
      %p56 = por %p54, %p55
      %p57 = scmp.ne.s32.totalorder %s49, %s52
      %p58 = scmp.eq.s32.totalorder %s25, 0
      %p59 = por %p57, %p58
      %p60 = scmp.ne.s32.totalorder %s49, %s52
      %p61 = scmp.eq.s32.totalorder %s30, 3
      %p62 = por %p60, %p61
      %p63 = scmp.ne.s32.totalorder %s52, %s53
      %p64 = scmp.eq.s32.totalorder %s30, 0
      %p65 = por %p63, %p64
      %p66 = scmp.ne.s32.totalorder %s52, %s53
      %p67 = scmp.eq.s32.totalorder %s31, 3
      %p68 = por %p66, %p67
      %p70 = scmp.ne.s32.totalorder %s53, %s69
      %p71 = scmp.eq.s32.totalorder %s31, 0
      %p72 = por %p70, %p71
      %s74 = sadd.s32 %s73, 1
      %p77 = scmp.eq.s32.totalorder %s25, 3
      %p78 = scmp.ne.s32.totalorder %s73, %s75
      %p79 = scmp.eq.s32.totalorder %s25, 0
      %p80 = por %p78, %p79
      %p81 = scmp.ne.s32.totalorder %s73, %s75
      %p82 = scmp.eq.s32.totalorder %s30, 3
      %p83 = por %p81, %p82
      %p84 = scmp.ne.s32.totalorder %s75, %s76
      %p85 = scmp.eq.s32.totalorder %s30, 0
      %p86 = por %p84, %p85
      %p87 = scmp.ne.s32.totalorder %s75, %s76
      %p88 = scmp.eq.s32.totalorder %s31, 3
      %p89 = por %p87, %p88
      %p91 = scmp.ne.s32.totalorder %s76, %s90
      %p92 = scmp.eq.s32.totalorder %s31, 0
      %p93 = por %p91, %p92
      %s95 = sadd.s32 %s94, 1
      %p98 = scmp.eq.s32.totalorder %s25, 3
      %p99 = scmp.ne.s32.totalorder %s94, %s96
      %p100 = scmp.eq.s32.totalorder %s25, 0
      %p101 = por %p99, %p100
      %p102 = scmp.ne.s32.totalorder %s94, %s96
      %p103 = scmp.eq.s32.totalorder %s30, 3
      %p104 = por %p102, %p103
      %p105 = scmp.ne.s32.totalorder %s96, %s97
      %p106 = scmp.eq.s32.totalorder %s30, 0
      %p107 = por %p105, %p106
      %p108 = scmp.ne.s32.totalorder %s96, %s97
      %p109 = scmp.eq.s32.totalorder %s31, 3
      %p110 = por %p108, %p109
      %p112 = scmp.ne.s32.totalorder %s97, %s111
      %p113 = scmp.eq.s32.totalorder %s31, 0
      %p114 = por %p112, %p113
      %s116 = sadd.s32 %s115, 1
      %p119 = scmp.eq.s32.totalorder %s25, 3
      %p120 = scmp.ne.s32.totalorder %s115, %s117
      %p121 = scmp.eq.s32.totalorder %s25, 0
      %p122 = por %p120, %p121
      %p123 = scmp.ne.s32.totalorder %s115, %s117
      %p124 = scmp.eq.s32.totalorder %s30, 3
      %p125 = por %p123, %p124
      %p126 = scmp.ne.s32.totalorder %s117, %s118
      %p127 = scmp.eq.s32.totalorder %s30, 0
      %p128 = por %p126, %p127
      %p129 = scmp.ne.s32.totalorder %s117, %s118
      %p130 = scmp.eq.s32.totalorder %s31, 3
      %p131 = por %p129, %p130
      %p133 = scmp.ne.s32.totalorder %s118, %s132
      %p134 = scmp.eq.s32.totalorder %s31, 0
      %p135 = por %p133, %p134
      %s137 = sadd.s32 %s136, 1
      %p140 = scmp.eq.s32.totalorder %s25, 3
      %p141 = scmp.ne.s32.totalorder %s136, %s138
      %p142 = scmp.eq.s32.totalorder %s25, 0
      %p143 = por %p141, %p142
      %p144 = scmp.ne.s32.totalorder %s136, %s138
      %p145 = scmp.eq.s32.totalorder %s30, 3
      %p146 = por %p144, %p145
      %p147 = scmp.ne.s32.totalorder %s138, %s139
      %p148 = scmp.eq.s32.totalorder %s30, 0
      %p149 = por %p147, %p148
      %p150 = scmp.ne.s32.totalorder %s138, %s139
      %p151 = scmp.eq.s32.totalorder %s31, 3
      %p152 = por %p150, %p151
      %p154 = scmp.ne.s32.totalorder %s139, %s153
      %p155 = scmp.eq.s32.totalorder %s31, 0
      %p156 = por %p154, %p155
      %s158 = sadd.s32 %s157, 1
      %p161 = scmp.eq.s32.totalorder %s25, 3
      %p162 = scmp.ne.s32.totalorder %s157, %s159
      %p163 = scmp.eq.s32.totalorder %s25, 0
      %p164 = por %p162, %p163
      %p165 = scmp.ne.s32.totalorder %s157, %s159
      %p166 = scmp.eq.s32.totalorder %s30, 3
      %p167 = por %p165, %p166
      %p168 = scmp.ne.s32.totalorder %s159, %s160
      %p169 = scmp.eq.s32.totalorder %s30, 0
      %p170 = por %p168, %p169
      %p171 = scmp.ne.s32.totalorder %s159, %s160
      %p172 = scmp.eq.s32.totalorder %s31, 3
      %p173 = por %p171, %p172
      %p175 = scmp.ne.s32.totalorder %s160, %s174
      %p176 = scmp.eq.s32.totalorder %s31, 0
      %p177 = por %p175, %p176
      %s179 = sadd.s32 %s178, 1
      %p182 = scmp.eq.s32.totalorder %s25, 3
      %p183 = scmp.ne.s32.totalorder %s178, %s180
      %p184 = scmp.eq.s32.totalorder %s25, 0
      %p185 = por %p183, %p184
      %p186 = scmp.ne.s32.totalorder %s178, %s180
      %p187 = scmp.eq.s32.totalorder %s30, 3
      %p188 = por %p186, %p187
      %p189 = scmp.ne.s32.totalorder %s180, %s181
      %p190 = scmp.eq.s32.totalorder %s30, 0
      %p191 = por %p189, %p190
      %p192 = scmp.ne.s32.totalorder %s180, %s181
      %p193 = scmp.eq.s32.totalorder %s31, 3
      %p194 = por %p192, %p193
      %p196 = scmp.ne.s32.totalorder %s181, %s195
      %p197 = scmp.eq.s32.totalorder %s31, 0
      %p198 = por %p196, %p197
      %s199 = ssub.s32 %s32, %s44
      %s200 = ssub.s32 %s33, %s40
      %s201 = sor.u32 %s199, %s200
      %p202 = scmp.eq.s32.totalorder %s201, 0
      %s204 = sadd.s32 %s203, 1
      %s205 = scalar_select %p202, %s203, %s204
      %p208 = pneg %p202
      %p209 = scmp.eq.s32.totalorder %s25, 3
      %p210 = por %p208, %p209
      %p211 = scmp.ne.s32.totalorder %s203, %s206
      %p212 = scmp.eq.s32.totalorder %s25, 0
      %p213 = por %p211, %p212
      %p214 = scmp.ne.s32.totalorder %s203, %s206
      %p215 = scmp.eq.s32.totalorder %s30, 3
      %p216 = por %p214, %p215
      %p217 = scmp.ne.s32.totalorder %s206, %s207
      %p218 = scmp.eq.s32.totalorder %s30, 0
      %p219 = por %p217, %p218
      %p220 = scmp.ne.s32.totalorder %s206, %s207
      %p221 = scmp.eq.s32.totalorder %s31, 3
      %p222 = por %p220, %p221
      %p224 = scmp.ne.s32.totalorder %s207, %s223
      %p225 = scmp.eq.s32.totalorder %s31, 0
      %p226 = por %p224, %p225
      %s227 = ssub.s32 %s32, %s44
      %s228 = ssub.s32 %s33, %s40
      %s229 = sor.u32 %s227, %s228
      %p230 = scmp.eq.s32.totalorder %s229, 0
      %s232 = sadd.s32 %s231, 1
      %s233 = scalar_select %p230, %s231, %s232
      %p236 = pneg %p230
      %p237 = scmp.eq.s32.totalorder %s25, 3
      %p238 = por %p236, %p237
      %p239 = scmp.ne.s32.totalorder %s231, %s234
      %p240 = scmp.eq.s32.totalorder %s25, 0
      %p241 = por %p239, %p240
      %p242 = scmp.ne.s32.totalorder %s231, %s234
      %p243 = scmp.eq.s32.totalorder %s30, 3
      %p244 = por %p242, %p243
      %p245 = scmp.ne.s32.totalorder %s234, %s235
      %p246 = scmp.eq.s32.totalorder %s30, 0
      %p247 = por %p245, %p246
      %p248 = scmp.ne.s32.totalorder %s234, %s235
      %p249 = scmp.eq.s32.totalorder %s31, 3
      %p250 = por %p248, %p249
      %p252 = scmp.ne.s32.totalorder %s235, %s251
      %p253 = scmp.eq.s32.totalorder %s31, 0
      %p254 = por %p252, %p253
      %s255 = ssub.s32 %s32, %s44
      %s256 = ssub.s32 %s33, %s40
      %s257 = sor.u32 %s255, %s256
      %p258 = scmp.eq.s32.totalorder %s257, 0
      %s260 = sadd.s32 %s259, 1
      %s261 = scalar_select %p258, %s259, %s260
      %p264 = pneg %p258
      %p265 = scmp.eq.s32.totalorder %s25, 3
      %p266 = por %p264, %p265
      %p267 = scmp.ne.s32.totalorder %s259, %s262
      %p268 = scmp.eq.s32.totalorder %s25, 0
      %p269 = por %p267, %p268
      %p270 = scmp.ne.s32.totalorder %s259, %s262
      %p271 = scmp.eq.s32.totalorder %s30, 3
      %p272 = por %p270, %p271
      %p273 = scmp.ne.s32.totalorder %s262, %s263
      %p274 = scmp.eq.s32.totalorder %s30, 0
      %p275 = por %p273, %p274
      %p276 = scmp.ne.s32.totalorder %s262, %s263
      %p277 = scmp.eq.s32.totalorder %s31, 3
      %p278 = por %p276, %p277
      %p280 = scmp.ne.s32.totalorder %s263, %s279
      %p281 = scmp.eq.s32.totalorder %s31, 0
      %p282 = por %p280, %p281
      %p283 = scmp.le.s32.totalorder 1, %s25
      %p284 = scmp.lt.s32.totalorder %s25, 5
      %p285 = pnand %p283, %p284
      %p286 = pneg %p285
      // Predicated region
      $region9: #{tpu_custom_call.1} parent=5 // pred_check
        _
      $region10: #{tpu_custom_call.1} parent=5 // pred_check_branch
        %288 = sbr.rel (%p285) target = $region12
      $region11: #{tpu_custom_call.1} parent=5 // pred_region
        %s289 = ssub.s32 %s25, 1
        // Predicated region
        $region13: #{tpu_custom_call.1} parent=11 // pred_check
          %p290 = pneg %p86
        $region14: #{tpu_custom_call.1} parent=11 // pred_check_branch
          %292 = sbr.rel (%p290) target = $region16
        $region15: #{tpu_custom_call.1} parent=11 // pred_region
          _
        $region16: #{tpu_custom_call.1} parent=11 // pred_fallthru
          _
        // Predicated region
        $region17: #{tpu_custom_call.1} parent=11 // pred_check
          %p293 = pneg %p107
        $region18: #{tpu_custom_call.1} parent=11 // pred_check_branch
          %295 = sbr.rel (%p293) target = $region20
        $region19: #{tpu_custom_call.1} parent=11 // pred_region
          _
        $region20: #{tpu_custom_call.1} parent=11 // pred_fallthru
          _
        // Predicated region
        $region21: #{tpu_custom_call.1} parent=11 // pred_check
          %p296 = pneg %p128
        $region22: #{tpu_custom_call.1} parent=11 // pred_check_branch
          %298 = sbr.rel (%p296) target = $region24
        $region23: #{tpu_custom_call.1} parent=11 // pred_region
          _
        $region24: #{tpu_custom_call.1} parent=11 // pred_fallthru
          _
        // Predicated region
        $region25: #{tpu_custom_call.1} parent=11 // pred_check
          %p299 = pneg %p149
        $region26: #{tpu_custom_call.1} parent=11 // pred_check_branch
          %301 = sbr.rel (%p299) target = $region28
        $region27: #{tpu_custom_call.1} parent=11 // pred_region
          _
        $region28: #{tpu_custom_call.1} parent=11 // pred_fallthru
          _
        // Predicated region
        $region29: #{tpu_custom_call.1} parent=11 // pred_check
          %p302 = pneg %p170
        $region30: #{tpu_custom_call.1} parent=11 // pred_check_branch
          %304 = sbr.rel (%p302) target = $region32
        $region31: #{tpu_custom_call.1} parent=11 // pred_region
          _
        $region32: #{tpu_custom_call.1} parent=11 // pred_fallthru
          _
        // Predicated region
        $region33: #{tpu_custom_call.1} parent=11 // pred_check
          %p305 = pneg %p191
        $region34: #{tpu_custom_call.1} parent=11 // pred_check_branch
          %307 = sbr.rel (%p305) target = $region36
        $region35: #{tpu_custom_call.1} parent=11 // pred_region
          _
        $region36: #{tpu_custom_call.1} parent=11 // pred_fallthru
          _
      $region12: #{tpu_custom_call.1} parent=5 // pred_fallthru
        _
      %p308 = scmp.lt.s32.totalorder %s25, 4
      // Predicated region
      $region37: #{tpu_custom_call.1} parent=5 // pred_check
        %p309 = pneg %p308
      $region38: #{tpu_custom_call.1} parent=5 // pred_check_branch
        %311 = sbr.rel (%p309) target = $region40
      $region39: #{tpu_custom_call.1} parent=5 // pred_region
        // Predicated region
        $region41: #{tpu_custom_call.1} parent=39 // pred_check
          %p312 = pneg %p59
        $region42: #{tpu_custom_call.1} parent=39 // pred_check_branch
          %314 = sbr.rel (%p312) target = $region44
        $region43: #{tpu_custom_call.1} parent=39 // pred_region
          %s315 = sand.u32 %s49, 1
          %s316 = scalar_lea.sflag [#allocation3], %s315
          %s317 = sand.u32 %s49, 1
          %s318 = smul.addr %s317, 32
          %s319 = scalar_lea.vmem [#allocation2], %s318
          %321 = vsyncadd %s316, 0
          %s322 = smul.addr %s32, 8
          %s323 = sadd.s32 %s33, %s322
          %s324 = smul.addr %s323, 8
          %s325 = scalar_lea.hbm %s0, %s324
          %s326 = sshll.u32 %s325, 4
          %s327 = int_to_ptr.hbm [resolvable:$true] %s326
          %s328 = sshll.u32 %s319, 4
          %s329 = int_to_ptr.vmem [resolvable:$true] %s328
          %334 = dma.hbm_to_vmem [thread:$0]  %s327, 512, %s329, %s316, 256, 128, 8
        $region44: #{tpu_custom_call.1} parent=39 // pred_fallthru
          _
      $region40: #{tpu_custom_call.1} parent=5 // pred_fallthru
        _
      %p335 = scmp.le.s32.totalorder 1, %s25
      %p336 = scmp.lt.s32.totalorder %s25, 5
      %p337 = pnand %p335, %p336
      %p338 = pneg %p337
      // Predicated region
      $region45: #{tpu_custom_call.1} parent=5 // pred_check
        _
      $region46: #{tpu_custom_call.1} parent=5 // pred_check_branch
        %340 = sbr.rel (%p337) target = $region48
      $region47: #{tpu_custom_call.1} parent=5 // pred_region
        %s341 = ssub.s32 %s25, 1
        %s342 = sand.u32 %s52, 1
        %s343 = scalar_lea.sflag [#allocation3], %s342
        %s344 = sand.u32 %s52, 1
        %s345 = smul.addr %s344, 32
        %s346 = scalar_lea.vmem [#allocation2], %s345
        // Predicated region
        $region49: #{tpu_custom_call.1} parent=47 // pred_check
          %p347 = pneg %p65
        $region50: #{tpu_custom_call.1} parent=47 // pred_check_branch
          %349 = sbr.rel (%p347) target = $region52
        $region51: #{tpu_custom_call.1} parent=47 // pred_region
          %351 = dma.done %s343, 512
        $region52: #{tpu_custom_call.1} parent=47 // pred_fallthru
          _
        %s352 = sand.u32 %s52, 1
        %s353 = scalar_lea.sflag [#allocation3], %s352
        %s354 = sand.u32 %s52, 1
        %s355 = smul.addr %s354, 32
        %s356 = scalar_lea.vmem [#allocation2], %s355
        %p357 = pneg %p65
        %p358 = pneg %p62
        %p359 = pneg %p86
        %p360 = pneg %p83
        %p361 = pneg %p107
        %p362 = pneg %p104
        %p363 = pneg %p128
        %p364 = pneg %p125
        %p365 = pneg %p149
        %p366 = pneg %p146
        %p367 = pneg %p170
        %p368 = pneg %p167
        %p369 = pneg %p191
        %p370 = pneg %p188
        %p371 = pneg %p219
        %p372 = pneg %p216
        %s373 = smul.u32 16, %s35
        %p374 = scmp.lt.s32.totalorder %s34, 1
        %s375 = scalar_select %p374, %s34, 1
        %p376 = scmp.lt.s32.totalorder %s373, 31
        %s377 = scalar_select %p376, %s373, 31
        %s378 = smul.addr %s375, 32
        %s379 = sadd.s32 %s377, %s378
        %s380 = smul.addr %s379, 4
        %s381 = scalar_lea.vmem %s7, %s380
        %p382 = pneg %p247
        %p383 = pneg %p244
        %s384 = sand.u32 %s234, 1
        %s385 = scalar_lea.sflag [#allocation4], %s384
        %s386 = sand.u32 %s234, 1
        %s387 = smul.addr %s386, 2
        %s388 = scalar_lea.vmem [#allocation5], %s387
        %p389 = pneg %p275
        %p390 = pneg %p272
        %s391 = sand.u32 %s262, 1
        %s392 = scalar_lea.sflag [#allocation7], %s391
        %s393 = sand.u32 %s262, 1
        %s394 = smul.addr %s393, 16
        %s395 = scalar_lea.vmem [#allocation6], %s394
        %s396 = smul.u32 16, %s35
        %p397 = scmp.lt.s32.totalorder %s34, 1
        %s398 = scalar_select %p397, %s34, 1
        %p399 = scmp.lt.s32.totalorder %s396, 31
        %s400 = scalar_select %p399, %s396, 31
        %s401 = smul.addr %s398, 32
        %s402 = sadd.s32 %s400, %s401
        %s403 = smul.addr %s402, 4
        %s404 = scalar_lea.vmem %s7, %s403
        %s405 = smul.u32 16, %s35
        %v407 = vld [vmem:[%s346] sm:$0xff]
        %v408 = vld [vmem:[%s346 + $0x8] sm:$0xff]
        %v409 = vld [vmem:[%s346 + $0x10] sm:$0xff]
        %v410 = vld [vmem:[%s346 + $0x18] sm:$0xff]
        %v411 = vpack.c.bf16 %v408, %v407
        %v412 = vpack.c.bf16 %v410, %v409
        %v413 = vld [vmem:[%s1] sm:$0x3]
        %v414 = vld [vmem:[%s4] sm:$0xf]
        %416 = vset.pattern.permute.xlu0 0
        %417 = vperm.xlu0 %416, %v414
        %v418 = vpop.permute.xlu0 %417
        %vm420 = vcmask 261120
        %v422 = vsel %vm420, %v413, 0
        %424 = vmatpush.bf16.msra.mxu0 0
        %425 = vmatpush.bf16.msra.mxu0 0
        %426 = vmatpush.bf16.msra.mxu0 0
        %427 = vmatpush.bf16.msra.mxu0 0
        %428 = vmatpush.bf16.msra.mxu0 0
        %429 = vmatpush.bf16.msra.mxu0 0
        %430 = vmatpush.bf16.msra.mxu0 %v412
        %431 = vmatpush.bf16.msra.mxu0 %v411
        %432 = vmatmul.bf16.gmra.mxu0 %v422
        %v433 = vpop.f32.mrf.mxu0
        %v434 = vadd.f32 %v418, %v433
        %v435 = vpop.f32.mrf.mxu0
        %436 = vdwg.mxu0
        %v437 = vld [vmem:[%s2] sm:$0x3]
        %v438 = vld [vmem:[%s5] sm:$0xf]
        %440 = vset.pattern.permute.xlu0 0
        %441 = vperm.xlu0 %440, %v438
        %v442 = vpop.permute.xlu0 %441
        %v445 = vsel %vm420, %v437, 0
        %447 = vmatpush.bf16.msra.mxu0 0
        %448 = vmatpush.bf16.msra.mxu0 0
        %449 = vmatpush.bf16.msra.mxu0 0
        %450 = vmatpush.bf16.msra.mxu0 0
        %451 = vmatpush.bf16.msra.mxu0 0
        %452 = vmatpush.bf16.msra.mxu0 0
        %453 = vmatpush.bf16.msra.mxu0 %v412
        %454 = vmatpush.bf16.msra.mxu0 %v411
        %455 = vmatmul.bf16.gmra.mxu0 %v445
        %v456 = vpop.f32.mrf.mxu0
        %v457 = vadd.f32 %v442, %v456
        %v458 = vpop.f32.mrf.mxu0
        %459 = vdwg.mxu0
        %v460 = vld [vmem:[%s3] sm:$0xf]
        %v461 = vld [vmem:[%s3 + $0x4] sm:$0xf]
        %v462 = vld [vmem:[%s3 + $0x8] sm:$0xf]
        %v463 = vld [vmem:[%s3 + $0xc] sm:$0xf]
        %v464 = vld [vmem:[%s6] sm:$0xff]
        %v465 = vld [vmem:[%s6 + $0x8] sm:$0xff]
        %v466 = vld [vmem:[%s6 + $0x10] sm:$0xff]
        %v467 = vld [vmem:[%s6 + $0x18] sm:$0xff]
        %469 = vset.pattern.permute.xlu0 0
        %470 = vperm.xlu0 %469, %v464
        %v471 = vpop.permute.xlu0 %470
        %474 = vset.pattern.permute.xlu0 0
        %475 = vperm.xlu0 %474, %v465
        %v476 = vpop.permute.xlu0 %475
        %479 = vset.pattern.permute.xlu0 0
        %480 = vperm.xlu0 %479, %v466
        %v481 = vpop.permute.xlu0 %480
        %484 = vset.pattern.permute.xlu0 0
        %485 = vperm.xlu0 %484, %v467
        %v486 = vpop.permute.xlu0 %485
        %v492 = vunpack.c.l.b16 %v460
        %v493 = vunpack.c.l.b16 %v461
        %v494 = vunpack.c.l.b16 %v462
        %v495 = vunpack.c.l.b16 %v463
        %v496 = vpack.c.b16 %v493, %v492
        %v497 = vpack.c.b16 %v495, %v494
        %v499 = vsel %vm420, %v496, 0
        %v502 = vsel %vm420, %v497, 0
        %504 = vmatpush.bf16.msra.mxu0 0
        %505 = vmatpush.bf16.msra.mxu0 0
        %506 = vmatpush.bf16.msra.mxu0 0
        %507 = vmatpush.bf16.msra.mxu0 0
        %508 = vmatpush.bf16.msra.mxu0 0
        %509 = vmatpush.bf16.msra.mxu0 0
        %510 = vmatpush.bf16.msra.mxu0 %v412
        %511 = vmatpush.bf16.msra.mxu0 %v411
        %512 = vmatmul.bf16.gmra.mxu0 %v499
        %v513 = vpop.f32.mrf.mxu0
        %v514 = vadd.f32 %v471, %v513
        %v515 = vpop.f32.mrf.mxu0
        %v516 = vadd.f32 %v476, %v515
        %517 = vmatmul.bf16.gmra.mxu0 %v502
        %v518 = vpop.f32.mrf.mxu0
        %v519 = vadd.f32 %v481, %v518
        %v520 = vpop.f32.mrf.mxu0
        %v521 = vadd.f32 %v486, %v520
        %522 = vdwg.mxu0
        %523 = vxpose.xlu0.b32.start [1/16] %v434, 128
        %524 = vxpose.xlu0.b32.cont [2/16] 0.0, 128
        %525 = vxpose.xlu0.b32.cont [3/16] 0.0, 128
        %526 = vxpose.xlu0.b32.cont [4/16] 0.0, 128
        %527 = vxpose.xlu0.b32.cont [5/16] 0.0, 128
        %528 = vxpose.xlu0.b32.cont [6/16] 0.0, 128
        %529 = vxpose.xlu0.b32.cont [7/16] 0.0, 128
        %530 = vxpose.xlu0.b32.cont [8/16] 0.0, 128
        %531 = vxpose.xlu0.b32.cont [9/16] 0.0, 128
        %532 = vxpose.xlu0.b32.cont [10/16] 0.0, 128
        %533 = vxpose.xlu0.b32.cont [11/16] 0.0, 128
        %534 = vxpose.xlu0.b32.cont [12/16] 0.0, 128
        %535 = vxpose.xlu0.b32.cont [13/16] 0.0, 128
        %536 = vxpose.xlu0.b32.cont [14/16] 0.0, 128
        %537 = vxpose.xlu0.b32.cont [15/16] 0.0, 128
        %538 = vxpose.xlu0.b32.end [16/16] 0.0, 128
        %v539 = vpop.trf.xlu0
        %v540 = vpop.trf.xlu0
        %v541 = vpop.trf.xlu0
        %v542 = vpop.trf.xlu0
        %v543 = vpop.trf.xlu0
        %v544 = vpop.trf.xlu0
        %v545 = vpop.trf.xlu0
        %v546 = vpop.trf.xlu0
        %v547 = vpop.trf.xlu0
        %v548 = vpop.trf.xlu0
        %v549 = vpop.trf.xlu0
        %v550 = vpop.trf.xlu0
        %v551 = vpop.trf.xlu0
        %v552 = vpop.trf.xlu0
        %v553 = vpop.trf.xlu0
        %v554 = vpop.trf.xlu0
        %v555 = vpack.c.bf16 %v539, %v539
        %v556 = vpack.c.bf16 %v540, %v540
        %v557 = vpack.c.bf16 %v541, %v541
        %v558 = vpack.c.bf16 %v542, %v542
        %v559 = vpack.c.bf16 %v543, %v543
        %v560 = vpack.c.bf16 %v544, %v544
        %v561 = vpack.c.bf16 %v545, %v545
        %v562 = vpack.c.bf16 %v546, %v546
        %v563 = vpack.c.bf16 %v547, %v547
        %v564 = vpack.c.bf16 %v548, %v548
        %v565 = vpack.c.bf16 %v549, %v549
        %v566 = vpack.c.bf16 %v550, %v550
        %v567 = vpack.c.bf16 %v551, %v551
        %v568 = vpack.c.bf16 %v552, %v552
        %v569 = vpack.c.bf16 %v553, %v553
        %v570 = vpack.c.bf16 %v554, %v554
        %vm571 = vcmask 27648
        %572 = vst.msk [vmem:[%s404] sm:$0xf] %vm571, %v555
        %573 = vst.msk [vmem:[%s404 + $0x4] sm:$0xf] %vm571, %v556
        %574 = vst.msk [vmem:[%s404 + $0x8] sm:$0xf] %vm571, %v557
        %575 = vst.msk [vmem:[%s404 + $0xc] sm:$0xf] %vm571, %v558
        %576 = vst.msk [vmem:[%s404 + $0x10] sm:$0xf] %vm571, %v559
        %577 = vst.msk [vmem:[%s404 + $0x14] sm:$0xf] %vm571, %v560
        %578 = vst.msk [vmem:[%s404 + $0x18] sm:$0xf] %vm571, %v561
        %579 = vst.msk [vmem:[%s404 + $0x1c] sm:$0xf] %vm571, %v562
        %580 = vst.msk [vmem:[%s404 + $0x20] sm:$0xf] %vm571, %v563
        %581 = vst.msk [vmem:[%s404 + $0x24] sm:$0xf] %vm571, %v564
        %582 = vst.msk [vmem:[%s404 + $0x28] sm:$0xf] %vm571, %v565
        %583 = vst.msk [vmem:[%s404 + $0x2c] sm:$0xf] %vm571, %v566
        %584 = vst.msk [vmem:[%s404 + $0x30] sm:$0xf] %vm571, %v567
        %585 = vst.msk [vmem:[%s404 + $0x34] sm:$0xf] %vm571, %v568
        %586 = vst.msk [vmem:[%s404 + $0x38] sm:$0xf] %vm571, %v569
        %587 = vst.msk [vmem:[%s404 + $0x3c] sm:$0xf] %vm571, %v570
        %v588 = vpack.c.bf16 %v457, %v457
        %589 = vst [vmem:[%s388] sm:$0x3] %v588
        %v590 = vpack.c.bf16 %v514, %v514
        %v591 = vpack.c.bf16 %v516, %v516
        %v592 = vpack.c.bf16 %v519, %v519
        %v593 = vpack.c.bf16 %v521, %v521
        %594 = vst [vmem:[%s395] sm:$0xf] %v590
        %595 = vst [vmem:[%s395 + $0x4] sm:$0xf] %v591
        %596 = vst [vmem:[%s395 + $0x8] sm:$0xf] %v592
        %597 = vst [vmem:[%s395 + $0xc] sm:$0xf] %v593
        %s598 = smul.u32 16, %s35
        %p599 = scmp.lt.s32.totalorder %s34, 1
        %s600 = scalar_select %p599, %s34, 1
        %p601 = scmp.lt.s32.totalorder %s598, 31
        %s602 = scalar_select %p601, %s598, 31
        %s603 = smul.addr %s600, 32
        %s604 = sadd.s32 %s602, %s603
        %s605 = smul.addr %s604, 4
        %s606 = scalar_lea.vmem %s7, %s605
        %s607 = sand.u32 %s234, 1
        %s608 = scalar_lea.sflag [#allocation4], %s607
        %s609 = sand.u32 %s234, 1
        %s610 = smul.addr %s609, 2
        %s611 = scalar_lea.vmem [#allocation5], %s610
        %s612 = sand.u32 %s262, 1
        %s613 = scalar_lea.sflag [#allocation7], %s612
        %s614 = sand.u32 %s262, 1
        %s615 = smul.addr %s614, 16
        %s616 = scalar_lea.vmem [#allocation6], %s615
        // Predicated region
        $region53: #{tpu_custom_call.1} parent=47 // pred_check
          %p617 = pneg %p216
        $region54: #{tpu_custom_call.1} parent=47 // pred_check_branch
          %619 = sbr.rel (%p617) target = $region56
        $region55: #{tpu_custom_call.1} parent=47 // pred_region
          %s620 = smul.u32 16, %s35
        $region56: #{tpu_custom_call.1} parent=47 // pred_fallthru
          _
        // Predicated region
        $region57: #{tpu_custom_call.1} parent=47 // pred_check
          %p621 = pneg %p244
        $region58: #{tpu_custom_call.1} parent=47 // pred_check_branch
          %623 = sbr.rel (%p621) target = $region60
        $region59: #{tpu_custom_call.1} parent=47 // pred_region
          %625 = vsyncadd %s608, 0
          %s626 = smul.addr %s34, 2
          %s627 = sadd.s32 %s35, %s626
          %s628 = smul.addr %s627, 2
          %s629 = scalar_lea.hbm %s8, %s628
          %s631 = sshll.u32 %s611, 4
          %s632 = int_to_ptr.vmem [resolvable:$true] %s631
          %s633 = sshll.u32 %s629, 4
          %s634 = int_to_ptr.hbm [resolvable:$true] %s633
          %636 = dma.vmem_to_hbm [thread:$0]  %s632, 32, %s634, %s608
        $region60: #{tpu_custom_call.1} parent=47 // pred_fallthru
          _
        // Predicated region
        $region61: #{tpu_custom_call.1} parent=47 // pred_check
          %p637 = pneg %p272
        $region62: #{tpu_custom_call.1} parent=47 // pred_check_branch
          %639 = sbr.rel (%p637) target = $region64
        $region63: #{tpu_custom_call.1} parent=47 // pred_region
          %641 = vsyncadd %s613, 0
          %s642 = smul.addr %s34, 8
          %s643 = sadd.s32 %s35, %s642
          %s644 = smul.addr %s643, 4
          %s645 = scalar_lea.hbm %s9, %s644
          %s646 = sshll.u32 %s616, 4
          %s647 = int_to_ptr.vmem [resolvable:$true] %s646
          %s648 = sshll.u32 %s645, 4
          %s649 = int_to_ptr.hbm [resolvable:$true] %s648
          %654 = dma.vmem_to_hbm [thread:$0]  %s647, 256, %s649, %s613, 64, 128, 4
        $region64: #{tpu_custom_call.1} parent=47 // pred_fallthru
          _
      $region48: #{tpu_custom_call.1} parent=5 // pred_fallthru
        _
      %p655 = scmp.le.s32.totalorder 2, %s25
      // Predicated region
      $region65: #{tpu_custom_call.1} parent=5 // pred_check
        %p656 = pneg %p655
      $region66: #{tpu_custom_call.1} parent=5 // pred_check_branch
        %658 = sbr.rel (%p656) target = $region68
      $region67: #{tpu_custom_call.1} parent=5 // pred_region
        %s659 = ssub.s32 %s25, 2
        // Predicated region
        $region69: #{tpu_custom_call.1} parent=67 // pred_check
          %p660 = pneg %p222
        $region70: #{tpu_custom_call.1} parent=67 // pred_check_branch
          %662 = sbr.rel (%p660) target = $region72
        $region71: #{tpu_custom_call.1} parent=67 // pred_region
          %s663 = smul.u32 16, %s37
          %p664 = scmp.lt.s32.totalorder %s36, 1
          %s665 = scalar_select %p664, %s36, 1
          %p666 = scmp.lt.s32.totalorder %s663, 31
          %s667 = scalar_select %p666, %s663, 31
          %s668 = smul.addr %s665, 32
          %s669 = sadd.s32 %s667, %s668
          %s670 = smul.addr %s669, 4
          %s671 = scalar_lea.vmem %s7, %s670
        $region72: #{tpu_custom_call.1} parent=67 // pred_fallthru
          _
        // Predicated region
        $region73: #{tpu_custom_call.1} parent=67 // pred_check
          %p672 = pneg %p250
        $region74: #{tpu_custom_call.1} parent=67 // pred_check_branch
          %674 = sbr.rel (%p672) target = $region76
        $region75: #{tpu_custom_call.1} parent=67 // pred_region
          %s675 = sand.u32 %s235, 1
          %s676 = scalar_lea.sflag [#allocation4], %s675
          %s677 = sand.u32 %s235, 1
          %s678 = smul.addr %s677, 2
          %s679 = scalar_lea.vmem [#allocation5], %s678
          %681 = dma.done %s676, 32
        $region76: #{tpu_custom_call.1} parent=67 // pred_fallthru
          _
        // Predicated region
        $region77: #{tpu_custom_call.1} parent=67 // pred_check
          %p682 = pneg %p278
        $region78: #{tpu_custom_call.1} parent=67 // pred_check_branch
          %684 = sbr.rel (%p682) target = $region80
        $region79: #{tpu_custom_call.1} parent=67 // pred_region
          %s685 = sand.u32 %s263, 1
          %s686 = scalar_lea.sflag [#allocation7], %s685
          %s687 = sand.u32 %s263, 1
          %s688 = smul.addr %s687, 16
          %s689 = scalar_lea.vmem [#allocation6], %s688
          %691 = dma.done %s686, 256
        $region80: #{tpu_custom_call.1} parent=67 // pred_fallthru
          _
      $region68: #{tpu_custom_call.1} parent=5 // pred_fallthru
        _
    $region6: #{tpu_custom_call.1} parent=1 // loop_footer
      %s29 = sadd.s32 1, %s25
    $region7: #{tpu_custom_call.1} parent=1 // loop_footer_branch
      %24 = sbr.rel target = $region3
    $region8: #{tpu_custom_call.1} parent=1 // loop_exit
      _
    %692 = vsyncpa [#allocation3], 1
    %s693 = scalar_lea.sflag [#allocation3], 1
    %694 = vsyncpa %s693, 1
    %695 = vsyncpa [#allocation4], 1
    %s696 = scalar_lea.sflag [#allocation4], 1
    %697 = vsyncpa %s696, 1
    %698 = vsyncpa [#allocation7], 1
    %s699 = scalar_lea.sflag [#allocation7], 1
    %700 = vsyncpa %s699, 1

</llo_original>
